<compile_context>
chip_gen: v6e
topology: v6e:2x2x1
jax: 0.10.0
libtpu: 0.0.40
codegen_flags: <defaults>
</compile_context>

<pallas_src>
import math
import functools

import jax
import jax.numpy as jnp
from jax.experimental import pallas as pl
from jax.experimental.pallas import tpu as pltpu


# ----------------------------------------------------------------------------
# Pallas kernels
# ----------------------------------------------------------------------------

def _conv1x1_kernel(x_ref, w_ref, b_ref, o_ref):
    # x: (1, Cin, H*W) block, w: (O, Cin), b: (O, 1) -> o: (1, O, H*W)  (bias fused, lane-dense)
    x = x_ref[0].astype(jnp.bfloat16)
    w = w_ref[...].astype(jnp.bfloat16)
    o_ref[0] = jnp.dot(w, x, preferred_element_type=jnp.float32) + b_ref[...]


@jax.jit
def _conv1x1(x, w, b):
    """1x1 conv (channel mix) with fused bias: x (B,Cin,H,W), w (O,Cin), b (O,1)."""
    B, Cin, H, W = x.shape
    O = w.shape[0]
    HW = H * W
    xr = x.reshape(B, Cin, HW)
    out = pl.pallas_call(
        _conv1x1_kernel,
        out_shape=jax.ShapeDtypeStruct((B, O, HW), jnp.float32),
        grid=(B,),
        in_specs=[pl.BlockSpec((1, Cin, HW), lambda bi: (bi, 0, 0)),
                  pl.BlockSpec((O, Cin), lambda bi: (0, 0)),     # constant block: weight DMA'd once
                  pl.BlockSpec((O, 1), lambda bi: (0, 0))],
        out_specs=pl.BlockSpec((1, O, HW), lambda bi: (bi, 0, 0)),
        compiler_params=pltpu.CompilerParams(dimension_semantics=("parallel",)),
    )(xr, w, b)
    return out.reshape(B, O, H, W)


def _mcl_kernel(x_ref, w_ref, o_ref):
    # x: (1,1,Fin,W), w: (1,Fout,Fin) -> o: (1,1,Fout,W); contraction over Fin, no transposes.
    x = x_ref[0, 0].astype(jnp.bfloat16)
    w = w_ref[0].astype(jnp.bfloat16)
    o_ref[0, 0] = jnp.dot(w, x, preferred_element_type=jnp.float32)


@jax.jit
def _mc_linear_pw(x, pw):
    """Per-channel feature matmul: x (B,C,Fin,W), pw (C,Fout,Fin) -> (B,C,Fout,W)."""
    B, C, Fin, W = x.shape
    Fout = pw.shape[1]
    return pl.pallas_call(
        _mcl_kernel,
        out_shape=jax.ShapeDtypeStruct((B, C, Fout, W), jnp.float32),
        grid=(C, B),   # channel-major: weight block index unchanged across inner batch loop -> no re-DMA
        in_specs=[pl.BlockSpec((1, 1, Fin, W), lambda ci, bi: (bi, ci, 0, 0)),
                  pl.BlockSpec((1, Fout, Fin), lambda ci, bi: (ci, 0, 0))],
        out_specs=pl.BlockSpec((1, 1, Fout, W), lambda ci, bi: (bi, ci, 0, 0)),
        compiler_params=pltpu.CompilerParams(dimension_semantics=("parallel", "parallel")),
    )(x, pw)


def _mcln_kernel(x_ref, g_ref, b_ref, o_ref, *, eps):
    # x: (1,1,H,W); normalize over the feature axis H (sublane reduction, no transpose).
    x = x_ref[0, 0]
    mean = jnp.mean(x, axis=0, keepdims=True)
    xc = x - mean
    var = jnp.mean(xc * xc, axis=0, keepdims=True)
    o_ref[0, 0] = xc * jax.lax.rsqrt(var + eps) * g_ref[0] + b_ref[0]


@functools.partial(jax.jit, static_argnames=("eps",))
def _mc_layer_norm(x, g, b, eps=1e-5):
    """x: (B,C,H,W) normalized over H; g, b: (C,H,1)."""
    B, C, H, W = x.shape
    kern = functools.partial(_mcln_kernel, eps=eps)
    return pl.pallas_call(
        kern,
        out_shape=jax.ShapeDtypeStruct((B, C, H, W), jnp.float32),
        grid=(C, B),
        in_specs=[pl.BlockSpec((1, 1, H, W), lambda ci, bi: (bi, ci, 0, 0)),
                  pl.BlockSpec((1, H, 1), lambda ci, bi: (ci, 0, 0)),
                  pl.BlockSpec((1, H, 1), lambda ci, bi: (ci, 0, 0))],
        out_specs=pl.BlockSpec((1, 1, H, W), lambda ci, bi: (bi, ci, 0, 0)),
        compiler_params=pltpu.CompilerParams(dimension_semantics=("parallel", "parallel")),
    )(x, g, b)


def _attn_kernel(*refs, n_pqk, scale):
    # q/k/v blocks: (1,1,heads,d,W); pqk_i blocks: (1,1,heads,W,W);
    # outputs: attn (1,1,heads,d,W), qk (1,1,heads,W,W).
    q_ref, k_ref, v_ref = refs[0], refs[1], refs[2]
    pqk_refs = refs[3:3 + n_pqk]
    o_ref, qk_ref = refs[3 + n_pqk], refs[4 + n_pqk]

    q = q_ref[0, 0].astype(jnp.bfloat16)
    k = k_ref[0, 0].astype(jnp.bfloat16)
    v = v_ref[0, 0].astype(jnp.bfloat16)

    # scores: contract the per-head dim d directly (no k transpose), bf16 MXU / f32 accumulate.
    s = jnp.einsum('hdq,hdk->hqk', q, k, preferred_element_type=jnp.float32) * scale
    for p_ref in pqk_refs:                      # fused prev_qk residual chain (no glue adds / zeros)
        s = s + p_ref[0, 0]
    qk_ref[0, 0] = s

    m = jnp.max(s, axis=-1, keepdims=True)
    e = jnp.exp(s - m)
    l = jnp.sum(e, axis=-1, keepdims=True)
    p = e * pl.reciprocal(l, approx=True)       # softmax denominator on the EUP slot
    # attn @ V producing (heads, d, Wq) directly — no output transpose needed.
    o_ref[0, 0] = jnp.einsum('hdk,hqk->hdq', v, p.astype(jnp.bfloat16),
                             preferred_element_type=jnp.float32)


@functools.partial(jax.jit, static_argnames=("scale",))
def _attention(q, k, v, pqks, scale):
    """q,k,v: (B,C,heads,d,W); pqks: tuple of (B,C,heads,W,W). Returns (out, qk)."""
    B, C, Hh, d, W = q.shape
    n_pqk = len(pqks)
    kern = functools.partial(_attn_kernel, n_pqk=n_pqk, scale=scale)
    blk_qkv = pl.BlockSpec((1, 1, Hh, d, W), lambda bi, ci: (bi, ci, 0, 0, 0))
    blk_qk = pl.BlockSpec((1, 1, Hh, W, W), lambda bi, ci: (bi, ci, 0, 0, 0))
    return pl.pallas_call(
        kern,
        out_shape=(jax.ShapeDtypeStruct((B, C, Hh, d, W), jnp.float32),
                   jax.ShapeDtypeStruct((B, C, Hh, W, W), jnp.float32)),
        grid=(B, C),
        in_specs=[blk_qkv, blk_qkv, blk_qkv] + [blk_qk] * n_pqk,
        out_specs=(blk_qkv, blk_qk),
        compiler_params=pltpu.CompilerParams(dimension_semantics=("parallel", "parallel")),
    )(q, k, v, *pqks)


# ----------------------------------------------------------------------------
# Parameter init (deterministic, synthetic)
# ----------------------------------------------------------------------------

class ParamRNG:
    def __init__(self, seed=0):
        self._key = jax.random.PRNGKey(seed)
        self._n = 0

    def uniform(self, shape, bound):
        self._n += 1
        k = jax.random.fold_in(self._key, self._n)
        return jax.random.uniform(k, shape, jnp.float32, minval=-bound, maxval=bound)


def conv_p(rng, cin, cout, kh, kw):
    bound = 1.0 / math.sqrt(cin * kh * kw)
    return {'w': rng.uniform((cout, cin, kh, kw), bound),
            'b': rng.uniform((cout,), bound)}


def mcl_p(rng, cin, cout, fin, fout, depthwise=False):
    p = {'pw': rng.uniform((cout, fout, fin), 1.0 / math.sqrt(fin))}
    p['dw'] = rng.uniform((cout, cin), 1.0 / math.sqrt(cin)) if (depthwise or cin != cout) else None
    return p


def mcln_p(channels, features):
    return {'g': jnp.ones((channels, features, 1), jnp.float32),
            'b': jnp.zeros((channels, features, 1), jnp.float32)}


def attn_p(rng, channels, num_heads, features, kernel_size=3):
    return {'num_heads': num_heads,
            'q_lin': mcl_p(rng, channels, channels, features, features),
            'q_conv': conv_p(rng, channels, channels, 1, kernel_size),
            'k_lin': mcl_p(rng, channels, channels, features, features),
            'k_conv': conv_p(rng, channels, channels, 1, kernel_size),
            'v_lin': mcl_p(rng, channels, channels, features, features),
            'v_conv': conv_p(rng, channels, channels, 1, kernel_size),
            'o_lin': mcl_p(rng, channels, channels, features, features)}


def resblock_p(rng, cin, cout, features, stride=(1, 1)):
    return {'norm': mcln_p(cin, features),
            'c1': conv_p(rng, cin, cout, 3, 3),
            'c2': conv_p(rng, cout, cout, 3, 3),
            'idt': conv_p(rng, cin, cout, 1, 1),
            'stride': stride}


def ft_enc_p(rng, channels, out_c, features, expansion, num_heads):
    return {'embed': conv_p(rng, channels, out_c, 1, 1) if channels != out_c else None,
            'norm1': mcln_p(out_c, features),
            'attn': attn_p(rng, out_c, num_heads, features),
            'norm2': mcln_p(out_c, features),
            'conv1': mcl_p(rng, out_c, out_c, features, expansion),
            'conv2': mcl_p(rng, out_c, out_c, expansion, features)}


def ft_dec_p(rng, channels, out_c, features, expansion, num_heads):
    return {'embed': conv_p(rng, channels, out_c, 1, 1) if channels != out_c else None,
            'embed_skip': conv_p(rng, channels + out_c, out_c, 1, 1),
            'norm1': mcln_p(out_c, features),
            'attn1': attn_p(rng, out_c, num_heads, features),
            'norm2': mcln_p(out_c, features),
            'attn2': attn_p(rng, out_c, num_heads, features),
            'norm3': mcln_p(out_c, features),
            'conv1': mcl_p(rng, out_c, out_c, features, expansion, depthwise=True),
            'conv2': mcl_p(rng, out_c, out_c, expansion, features)}


def init_generator(seed, in_channels, out_channels, channels, n_fft, num_heads, nam, expansions):
    rng = ParamRNG(seed)
    max_bin = n_fft // 2
    cm = [1, 2, 4, 6, 8, 10, 12, 14, 16]
    P = {'max_bin': max_bin}
    P['pos_conv'] = conv_p(rng, in_channels, 1, 1, 1)

    P['enc'], P['enc_t'] = [], []
    in_c = in_channels + 1
    for i in range(9):
        out_c = channels * cm[i]
        feat_in = max_bin >> max(0, i - 1)    # features seen by the FrameEncoder's input
        feat_out = max_bin >> i               # features seen by the transformer
        stride = (1, 1) if i == 0 else (2, 1)
        P['enc'].append(resblock_p(rng, in_c, out_c, feat_in, stride=stride))
        heads = num_heads if i < 8 else num_heads // 2
        P['enc_t'].append(ft_enc_p(rng, out_c, nam, feat_out, expansions[i], heads))
        in_c = out_c + nam

    P['dec'], P['dec_t'] = [], []
    out_mult = [14, 12, 10, 8, 6, 4, 2, 1]
    prev_ch = channels * 16 + nam             # channels of e9
    for d in range(8):
        out_c = channels * out_mult[d]
        feat = max_bin >> (7 - d)
        skip_ch = channels * out_mult[d] + nam
        P['dec'].append(resblock_p(rng, prev_ch + skip_ch, out_c, feat, stride=(1, 1)))
        P['dec_t'].append(ft_dec_p(rng, out_c, nam, feat, expansions[7 - d], num_heads))
        prev_ch = out_c + nam

    P['out'] = conv_p(rng, channels + nam, out_channels, 1, 1)
    return P


# ----------------------------------------------------------------------------
# Module forwards (glue around the Pallas kernels)
# ----------------------------------------------------------------------------

def conv2d(x, p, stride=(1, 1), padding=(0, 0)):
    """NCHW conv.  1x1/stride-1 convs go to the Pallas channel-mix kernel (bias fused);
    spatial / strided convs use lax.conv_general_dilated (no im2col HBM expansion)."""
    w, b = p['w'], p['b']
    O, Cin, kh, kw = w.shape
    if kh == 1 and kw == 1 and stride == (1, 1):
        return _conv1x1(x, w.reshape(O, Cin), b.reshape(O, 1))
    out = jax.lax.conv_general_dilated(
        x, w, window_strides=stride,
        padding=((padding[0], padding[0]), (padding[1], padding[1])),
        dimension_numbers=('NCHW', 'OIHW', 'NCHW'))
    return out + b[None, :, None, None]


def mc_linear(p, x):
    """MultichannelLinear: optional channel-mix (dw, glue einsum — tiny) + per-channel
    feature matmul (pw) in the Pallas kernel with channel-indexed weight blocks."""
    dw = p['dw']
    if dw is not None:
        x = jnp.einsum('oc,bchw->bohw', dw, x)
    return _mc_linear_pw(x, p['pw'])


def mc_layer_norm(p, x, eps=1e-5):
    """MultichannelLayerNorm over the feature (H) axis, per-channel affine — no transposes."""
    return _mc_layer_norm(x, p['g'], p['b'], eps=eps)


def rotary(t):
    """Rotary embedding over the frame axis. t: (B, C, heads, d, W), d even."""
    d, W = t.shape[-2], t.shape[-1]
    inv_freq = 1.0 / (10000.0 ** (jnp.arange(0, d, 2, dtype=jnp.float32) / d))
    freqs = inv_freq[:, None] * jnp.arange(W, dtype=jnp.float32)[None, :]   # (d//2, W)
    cos = jnp.repeat(jnp.cos(freqs), 2, axis=0)                              # (d, W)
    sin = jnp.repeat(jnp.sin(freqs), 2, axis=0)
    x1 = t[..., 0::2, :]
    x2 = t[..., 1::2, :]
    rot = jnp.stack([-x2, x1], axis=-2).reshape(t.shape)
    return t * cos + rot * sin


def mc_attention(p, x, mem=None, pqks=()):
    """MultichannelMultiheadAttention over frames; pqks are summed into the scores in-kernel.
    Returns (out, qk) with qk = scaled scores + sum(pqks)."""
    B, C, H, W = x.shape
    heads = p['num_heads']
    d = H // heads
    src = x if mem is None else mem

    q = conv2d(mc_linear(p['q_lin'], x), p['q_conv'], padding=(0, 1))
    k = conv2d(mc_linear(p['k_lin'], src), p['k_conv'], padding=(0, 1))
    v = conv2d(mc_linear(p['v_lin'], src), p['v_conv'], padding=(0, 1))

    # head split is a free reshape in the (features, frames) layout — no transposes.
    qh = rotary(q.reshape(B, C, heads, d, W))
    kh = rotary(k.reshape(B, C, heads, d, W))
    vh = v.reshape(B, C, heads, d, W)

    a, qk = _attention(qh, kh, vh, tuple(pqks), scale=1.0 / math.sqrt(H))
    out = mc_linear(p['o_lin'], a.reshape(B, C, H, W))
    return out, qk


def resblock_fwd(p, x):
    h = mc_layer_norm(p['norm'], x)
    h = conv2d(h, p['c1'], padding=(1, 1))
    h = jax.nn.gelu(h, approximate=False)
    h = conv2d(h, p['c2'], stride=p['stride'], padding=(1, 1))
    idt = conv2d(x, p['idt'], stride=p['stride'])
    return idt + h


def upsample_h2(x):
    """nn.Upsample(scale_factor=(2,1), mode='bilinear', align_corners=True)."""
    B, C, H, W = x.shape
    Ho = 2 * H
    pos = jnp.arange(Ho, dtype=jnp.float32) * (H - 1) / (Ho - 1)
    lo = jnp.floor(pos).astype(jnp.int32)
    hi = jnp.minimum(lo + 1, H - 1)
    frac = pos - lo.astype(jnp.float32)
    xlo = x[:, :, lo, :]
    xhi = x[:, :, hi, :]
    return xlo * (1.0 - frac)[None, None, :, None] + xhi * frac[None, None, :, None]


def frame_decoder_fwd(p, x, skip):
    return resblock_fwd(p, jnp.concatenate([upsample_h2(x), skip], axis=1))


def ft_encoder_fwd(p, x, prev_qk=None):
    h = conv2d(x, p['embed']) if p['embed'] is not None else x
    pqks = () if prev_qk is None else (prev_qk,)
    z, qk = mc_attention(p['attn'], mc_layer_norm(p['norm1'], h), pqks=pqks)
    h = h + z                                               # dropout == identity (inference)
    z = mc_linear(p['conv1'], mc_layer_norm(p['norm2'], h))
    z = mc_linear(p['conv2'], jax.nn.gelu(z, approximate=False))
    h = h + z
    return jnp.concatenate([x, h], axis=1), h, qk


def ft_decoder_fwd(p, x, skip, prev_qk1, prev_qk2, skip_qk):
    h = conv2d(x, p['embed']) if p['embed'] is not None else x
    skip_e = conv2d(skip, p['embed_skip'])
    pqks1 = (skip_qk,) if prev_qk1 is None else (prev_qk1, skip_qk)
    z, new_qk1 = mc_attention(p['attn1'], mc_layer_norm(p['norm1'], h), pqks=pqks1)
    h = h + z
    pqks2 = (skip_qk, new_qk1) if prev_qk2 is None else (skip_qk, new_qk1, prev_qk2)
    z, new_qk2 = mc_attention(p['attn2'], mc_layer_norm(p['norm2'], h), mem=skip_e, pqks=pqks2)
    h = h + z
    z = mc_linear(p['conv1'], mc_layer_norm(p['norm3'], h))
    z = mc_linear(p['conv2'], jax.nn.gelu(z, approximate=False))
    h = h + z
    return jnp.concatenate([x, h], axis=1), new_qk1, new_qk2


def positional_embedding(P, x):
    # TODO(synk): ConvolutionalEmbedding internals not provided in the prompt; surrogate =
    # 1x1 conv of the input to 1 channel + sinusoidal positional encoding over frames.
    B, C, H, W = x.shape
    pos = jnp.arange(W, dtype=jnp.float32)
    i = jnp.arange(H, dtype=jnp.float32)
    div = jnp.power(10000.0, (2.0 * jnp.floor(i / 2.0)) / H)
    ang = pos[None, :] / div[:, None]                       # (H, W)
    pe = jnp.where((jnp.arange(H) % 2 == 0)[:, None], jnp.sin(ang), jnp.cos(ang))
    gate = conv2d(x, P['pos_conv'])                         # (B, 1, H, W)
    return gate + pe[None, None]


def generator_forward(P, x):
    pe = positional_embedding(P, x)
    x = jnp.concatenate([x, pe], axis=1)

    enc_outs, qks = [], []
    h = x
    prev_qk = None
    for i in range(9):
        h = resblock_fwd(P['enc'][i], h)                    # FrameEncoder
        if i < 8:
            h, _, qk = ft_encoder_fwd(P['enc_t'][i], h, prev_qk=prev_qk)
            prev_qk = qk
            qks.append(qk)
        else:
            h, _, _ = ft_encoder_fwd(P['enc_t'][i], h, prev_qk=None)
        enc_outs.append(h)

    hcur = enc_outs[8]
    pqk1, pqk2 = None, None
    for d in range(8):
        skip = enc_outs[7 - d]                              # e8 ... e1
        skip_qk = qks[7 - d]                                # qk8 ... qk1
        hcur = frame_decoder_fwd(P['dec'][d], hcur, skip)
        hcur, pqk1, pqk2 = ft_decoder_fwd(P['dec_t'][d], hcur, skip, pqk1, pqk2, skip_qk)

    return conv2d(hcur, P['out'])


# ----------------------------------------------------------------------------
# Main
# ----------------------------------------------------------------------------

if __name__ == "__main__":
    # Small-but-consistent config: n_fft=1024 -> max_bin=512 (9 downsampling levels reach 2 bins),
    # num_heads=2 keeps every rotary head dim even, tiny expansions keep the FFNs small.
    B, in_ch, out_ch, channels = 2, 2, 2, 2
    n_fft, num_heads, nam = 1024, 2, 1
    frames = 8
    expansions = [32] * 9

    params = init_generator(0, in_ch, out_ch, channels, n_fft, num_heads, nam, expansions)

    x = jax.random.normal(jax.random.PRNGKey(0), (B, in_ch, n_fft // 2, frames), jnp.float32)
    y = generator_forward(params, x)
    y = jax.block_until_ready(y)

    assert y.shape == (B, out_ch, n_fft // 2, frames), y.shape
    assert bool(jnp.all(jnp.isfinite(y)))
    print("KERNEL_OK")
</pallas_src>

<mosaic_0001>
module attributes {stable_mosaic.version = 11 : i64} {
  func.func @_conv1x1_kernel(%arg0: i32, %arg1: memref<1x2x4096xf32, #tpu.memory_space<vmem>>, %arg2: memref<1x2xf32, #tpu.memory_space<vmem>>, %arg3: memref<1x1xf32, #tpu.memory_space<vmem>>, %arg4: memref<1x1x4096xf32, #tpu.memory_space<vmem>>) attributes {dimension_semantics = [#tpu.dimension_semantics<parallel>], iteration_bounds = array<i64: 2>, scalar_prefetch = 0 : i64, scratch_operands = 0 : i64, tpu.core_type = #tpu.core_type<tc>, window_params = [{transform_indices = @transform_0, window_bounds = array<i64: 1, 2, 4096>}, {pipeline_mode = #tpu.pipeline_mode<synchronous>, transform_indices = @transform_1, window_bounds = array<i64: 1, 2>}, {pipeline_mode = #tpu.pipeline_mode<synchronous>, transform_indices = @transform_2, window_bounds = array<i64: 1, 1>}, {transform_indices = @transform_3, window_bounds = array<i64: 1, 1, 4096>}]} {
    %c0 = arith.constant 0 : index
    %c0_0 = arith.constant 0 : index
    %c0_1 = arith.constant 0 : index
    %0 = vector.load %arg1[%c0, %c0_0, %c0_1] : memref<1x2x4096xf32, #tpu.memory_space<vmem>>, vector<1x2x4096xf32>
    %1 = vector.shape_cast %0 : vector<1x2x4096xf32> to vector<2x4096xf32>
    %2 = arith.truncf %1 : vector<2x4096xf32> to vector<2x4096xbf16>
    %c0_2 = arith.constant 0 : index
    %c0_3 = arith.constant 0 : index
    %3 = vector.load %arg2[%c0_2, %c0_3] : memref<1x2xf32, #tpu.memory_space<vmem>>, vector<1x2xf32>
    %4 = arith.truncf %3 : vector<1x2xf32> to vector<1x2xbf16>
    %cst = arith.constant dense<0.000000e+00> : vector<1x4096xf32>
    %5 = tpu.matmul %4, %2, %cst {dimension_numbers = #tpu.dot_dimension_numbers<[1], [0], [0], [1], [0, 0, 1, 1], [], []>} : vector<1x2xbf16>, vector<2x4096xbf16>, vector<1x4096xf32> -> vector<1x4096xf32>
    %c0_4 = arith.constant 0 : index
    %c0_5 = arith.constant 0 : index
    %6 = vector.load %arg3[%c0_4, %c0_5] : memref<1x1xf32, #tpu.memory_space<vmem>>, vector<1x1xf32>
    %7 = vector.broadcast %6 : vector<1x1xf32> to vector<1x4096xf32>
    %8 = arith.addf %5, %7 : vector<1x4096xf32>
    %c0_6 = arith.constant 0 : index
    %c0_7 = arith.constant 0 : index
    %c0_8 = arith.constant 0 : index
    %9 = vector.load %arg4[%c0_6, %c0_7, %c0_8] : memref<1x1x4096xf32, #tpu.memory_space<vmem>>, vector<1x1x4096xf32>
    %10 = vector.shape_cast %9 : vector<1x1x4096xf32> to vector<1x4096xf32>
    %11 = vector.shape_cast %8 : vector<1x4096xf32> to vector<1x1x4096xf32>
    tpu.vector_store %arg4[%c0_6, %c0_7, %c0_8], %11 {strides = array<i32>} : memref<1x1x4096xf32, #tpu.memory_space<vmem>>, vector<1x1x4096xf32>,
    return
  }
  func.func @transform_0(%arg0: i32) -> (i32, i32, i32) {
    %c0_i32 = arith.constant 0 : i32
    %c0_i32_0 = arith.constant 0 : i32
    %c0_i32_1 = arith.constant 0 : i32
    return %arg0, %c0_i32, %c0_i32_0 : i32, i32, i32
  }
  func.func @transform_1(%arg0: i32) -> (i32, i32) {
    %c0_i32 = arith.constant 0 : i32
    %c0_i32_0 = arith.constant 0 : i32
    %c0_i32_1 = arith.constant 0 : i32
    return %c0_i32, %c0_i32_0 : i32, i32
  }
  func.func @transform_2(%arg0: i32) -> (i32, i32) {
    %c0_i32 = arith.constant 0 : i32
    %c0_i32_0 = arith.constant 0 : i32
    %c0_i32_1 = arith.constant 0 : i32
    return %c0_i32, %c0_i32_0 : i32, i32
  }
  func.func @transform_3(%arg0: i32) -> (i32, i32, i32) {
    %c0_i32 = arith.constant 0 : i32
    %c0_i32_0 = arith.constant 0 : i32
    %c0_i32_1 = arith.constant 0 : i32
    return %arg0, %c0_i32, %c0_i32_0 : i32, i32, i32
  }
}

</mosaic_0001>

<llo_original>
// kernel: _conv1x1.1
$region0: #{_conv1x1.1}
  #allocation0 [shape = 'u32[]', space=smem, size = 0x4, offset = 0x4, fixed_abs, tag = 'smem constant byte address 0x4 - core index']
  #allocation1 [shape = 'u32[144,128]{1,0:T(1,128)}', space=vmem, size = 0x12000, scoped, tag = 'internal scratch']
  #allocation2 [shape = 'f32[1,1]{1,0:T(1,128)S(1)}', space=vmem, size = 0x200, scoped, tag = 'scoped memory for _conv1x1.1']
  %s0 = inlined_call_operand.vmem [shape: f32[2,2,4096], index: 0, kind: input, shape index: {}]
  %s1 = inlined_call_operand.vmem [shape: f32[1,2], index: 1, kind: input, shape index: {}]
  %s2 = inlined_call_operand.<no memory space> [shape: f32[1,1], index: 2, kind: input, shape index: {}]
  %s3 = inlined_call_operand.vmem [shape: f32[2,1,4096], index: 3, kind: output, shape index: {}]
  %s4 = sld [smem:[#allocation0]]
  $region45: #{_conv1x1.1} parent=0
    _
  %s6 = ssub.s32 1, %s4
  %s7 = scalar_select 0, %s6, %s4
  %v8 = vstv %s2
  %9 = vst [vmem:[#allocation2] sm:$0x1] %v8
  loop: start=0, step=1, limit=4
  $region2: #{_conv1x1.1} parent=0 // loop_pre_header
    _
  $region3: #{_conv1x1.1} parent=0 // loop_header
    %s11 = sphi 0, %s15
    %p12 = scmp.ge.s32.totalorder %s11, 4
    %s21 = sphi 0, %s23
    %s24 = sphi 0, %s21
    %s25 = sphi 0, %s24
    %s41 = sphi 0, %s25
    %s45 = sphi 0, %s45
    %s47 = sphi 0, %s45
    %s48 = sphi 0, %s47
    %s62 = sphi 0, %s48
    %s66 = sphi 0, %s66
    %s68 = sphi 0, %s66
    %s69 = sphi 0, %s68
    %s83 = sphi 0, %s69
    %s89 = sphi 0, %s91
    %s92 = sphi 0, %s89
    %s93 = sphi 0, %s92
    %s109 = sphi 0, %s93
  $region4: #{_conv1x1.1} parent=0 // loop_header_branch
    %14 = sbr.rel (%p12) target = $region8
  $region5: #{_conv1x1.1} parent=0 // loop_body
    %s16 = ssub.s32 %s11, 1
    %s17 = ssub.s32 %s11, 2
    %s18 = sadd.s32 %s11, 1
    %s19 = ssub.s32 %s11, %s18
    %p20 = scmp.eq.s32.totalorder %s19, 0
    %s22 = sadd.s32 %s21, 1
    %s23 = scalar_select %p20, %s21, %s22
    %p26 = pneg %p20
    %p27 = scmp.eq.s32.totalorder %s11, 1
    %p28 = por %p26, %p27
    %p29 = scmp.ne.s32.totalorder %s21, %s24
    %p30 = scmp.eq.s32.totalorder %s11, 0
    %p31 = por %p29, %p30
    %p32 = scmp.ne.s32.totalorder %s21, %s24
    %p33 = scmp.eq.s32.totalorder %s16, 1
    %p34 = por %p32, %p33
    %p35 = scmp.ne.s32.totalorder %s24, %s25
    %p36 = scmp.eq.s32.totalorder %s16, 0
    %p37 = por %p35, %p36
    %p38 = scmp.ne.s32.totalorder %s24, %s25
    %p39 = scmp.eq.s32.totalorder %s17, 1
    %p40 = por %p38, %p39
    %p42 = scmp.ne.s32.totalorder %s25, %s41
    %p43 = scmp.eq.s32.totalorder %s17, 0
    %p44 = por %p42, %p43
    %s46 = sadd.s32 %s45, 1
    %p49 = scmp.eq.s32.totalorder %s11, 1
    %p50 = scmp.ne.s32.totalorder %s45, %s47
    %p51 = scmp.eq.s32.totalorder %s11, 0
    %p52 = por %p50, %p51
    %p53 = scmp.ne.s32.totalorder %s45, %s47
    %p54 = scmp.eq.s32.totalorder %s16, 1
    %p55 = por %p53, %p54
    %p56 = scmp.ne.s32.totalorder %s47, %s48
    %p57 = scmp.eq.s32.totalorder %s16, 0
    %p58 = por %p56, %p57
    %p59 = scmp.ne.s32.totalorder %s47, %s48
    %p60 = scmp.eq.s32.totalorder %s17, 1
    %p61 = por %p59, %p60
    %p63 = scmp.ne.s32.totalorder %s48, %s62
    %p64 = scmp.eq.s32.totalorder %s17, 0
    %p65 = por %p63, %p64
    %s67 = sadd.s32 %s66, 1
    %p70 = scmp.eq.s32.totalorder %s11, 1
    %p71 = scmp.ne.s32.totalorder %s66, %s68
    %p72 = scmp.eq.s32.totalorder %s11, 0
    %p73 = por %p71, %p72
    %p74 = scmp.ne.s32.totalorder %s66, %s68
    %p75 = scmp.eq.s32.totalorder %s16, 1
    %p76 = por %p74, %p75
    %p77 = scmp.ne.s32.totalorder %s68, %s69
    %p78 = scmp.eq.s32.totalorder %s16, 0
    %p79 = por %p77, %p78
    %p80 = scmp.ne.s32.totalorder %s68, %s69
    %p81 = scmp.eq.s32.totalorder %s17, 1
    %p82 = por %p80, %p81
    %p84 = scmp.ne.s32.totalorder %s69, %s83
    %p85 = scmp.eq.s32.totalorder %s17, 0
    %p86 = por %p84, %p85
    %s87 = ssub.s32 %s11, %s18
    %p88 = scmp.eq.s32.totalorder %s87, 0
    %s90 = sadd.s32 %s89, 1
    %s91 = scalar_select %p88, %s89, %s90
    %p94 = pneg %p88
    %p95 = scmp.eq.s32.totalorder %s11, 1
    %p96 = por %p94, %p95
    %p97 = scmp.ne.s32.totalorder %s89, %s92
    %p98 = scmp.eq.s32.totalorder %s11, 0
    %p99 = por %p97, %p98
    %p100 = scmp.ne.s32.totalorder %s89, %s92
    %p101 = scmp.eq.s32.totalorder %s16, 1
    %p102 = por %p100, %p101
    %p103 = scmp.ne.s32.totalorder %s92, %s93
    %p104 = scmp.eq.s32.totalorder %s16, 0
    %p105 = por %p103, %p104
    %p106 = scmp.ne.s32.totalorder %s92, %s93
    %p107 = scmp.eq.s32.totalorder %s17, 1
    %p108 = por %p106, %p107
    %p110 = scmp.ne.s32.totalorder %s93, %s109
    %p111 = scmp.eq.s32.totalorder %s17, 0
    %p112 = por %p110, %p111
    %p113 = scmp.le.s32.totalorder 1, %s11
    %p114 = scmp.lt.s32.totalorder %s11, 3
    %p115 = pnand %p113, %p114
    %p116 = pneg %p115
    // Predicated region
    $region9: #{_conv1x1.1} parent=5 // pred_check
      _
    $region10: #{_conv1x1.1} parent=5 // pred_check_branch
      %118 = sbr.rel (%p115) target = $region12
    $region11: #{_conv1x1.1} parent=5 // pred_region
      %s119 = ssub.s32 %s11, 1
      // Predicated region
      $region13: #{_conv1x1.1} parent=11 // pred_check
        %p120 = pneg %p58
      $region14: #{_conv1x1.1} parent=11 // pred_check_branch
        %122 = sbr.rel (%p120) target = $region16
      $region15: #{_conv1x1.1} parent=11 // pred_region
        _
      $region16: #{_conv1x1.1} parent=11 // pred_fallthru
        _
      // Predicated region
      $region17: #{_conv1x1.1} parent=11 // pred_check
        %p123 = pneg %p79
      $region18: #{_conv1x1.1} parent=11 // pred_check_branch
        %125 = sbr.rel (%p123) target = $region20
      $region19: #{_conv1x1.1} parent=11 // pred_region
        _
      $region20: #{_conv1x1.1} parent=11 // pred_fallthru
        _
    $region12: #{_conv1x1.1} parent=5 // pred_fallthru
      _
    %p126 = scmp.lt.s32.totalorder %s11, 2
    // Predicated region
    $region21: #{_conv1x1.1} parent=5 // pred_check
      %p127 = pneg %p126
    $region22: #{_conv1x1.1} parent=5 // pred_check_branch
      %129 = sbr.rel (%p127) target = $region24
    $region23: #{_conv1x1.1} parent=5 // pred_region
      // Predicated region
      $region25: #{_conv1x1.1} parent=23 // pred_check
        %p130 = pneg %p31
      $region26: #{_conv1x1.1} parent=23 // pred_check_branch
        %132 = sbr.rel (%p130) target = $region28
      $region27: #{_conv1x1.1} parent=23 // pred_region
        %p133 = scmp.lt.s32.totalorder %s11, 1
        %s134 = scalar_select %p133, %s11, 1
        %s135 = smul.addr %s134, 32
        %s136 = smul.addr %s135, 2
        %s137 = scalar_lea.vmem %s0, %s136
      $region28: #{_conv1x1.1} parent=23 // pred_fallthru
        _
    $region24: #{_conv1x1.1} parent=5 // pred_fallthru
      _
    %p138 = scmp.le.s32.totalorder 1, %s11
    %p139 = scmp.lt.s32.totalorder %s11, 3
    %p140 = pnand %p138, %p139
    %p141 = pneg %p140
    // Predicated region
    $region29: #{_conv1x1.1} parent=5 // pred_check
      _
    $region30: #{_conv1x1.1} parent=5 // pred_check_branch
      %143 = sbr.rel (%p140) target = $region32
    $region31: #{_conv1x1.1} parent=5 // pred_region
      %s144 = ssub.s32 %s11, 1
      %p145 = scmp.lt.s32.totalorder %s16, 1
      %s146 = scalar_select %p145, %s16, 1
      %s147 = smul.addr %s146, 32
      %s148 = smul.addr %s147, 2
      %s149 = scalar_lea.vmem %s0, %s148
      %p150 = pneg %p37
      %p151 = pneg %p34
      %p152 = pneg %p58
      %p153 = pneg %p55
      %p154 = pneg %p79
      %p155 = pneg %p76
      %p156 = pneg %p105
      %p157 = pneg %p102
      %p158 = scmp.lt.s32.totalorder %s16, 1
      %s159 = scalar_select %p158, %s16, 1
      %s160 = smul.addr %s159, 32
      %s161 = scalar_lea.vmem %s3, %s160
      %p162 = scmp.lt.s32.totalorder %s16, 1
      %s163 = scalar_select %p162, %s16, 1
      %s164 = smul.addr %s163, 32
      %s165 = smul.addr %s164, 2
      %s166 = scalar_lea.vmem %s0, %s165
      %p167 = scmp.lt.s32.totalorder %s16, 1
      %s168 = scalar_select %p167, %s16, 1
      %s169 = smul.addr %s168, 32
      %s170 = scalar_lea.vmem %s3, %s169
      %v172 = vld [vmem:[%s166] sm:$0xff]
      %v173 = vld [vmem:[%s166 + $0x8] sm:$0xff]
      %v174 = vld [vmem:[%s166 + $0x10] sm:$0xff]
      %v175 = vld [vmem:[%s166 + $0x18] sm:$0xff]
      %v176 = vld [vmem:[%s166 + $0x20] sm:$0xff]
      %v177 = vld [vmem:[%s166 + $0x28] sm:$0xff]
      %v178 = vld [vmem:[%s166 + $0x30] sm:$0xff]
      %v179 = vld [vmem:[%s166 + $0x38] sm:$0xff]
      %v188 = vcombine.high %v172, %v172
      %v190 = vunpack.c.l.s4 1983009808
      %v191 = vunpack.c.0.s8 %v190
      %v192 = vlaneseq
      %v193 = vshrl.u32 %v192, 7
      %v194 = vsub.s32 %v191, %v193
      %v195 = vrot.slane %v172, %v194
      %v197 = vunpack.c.l.s4 1983009808
      %v198 = vunpack.c.0.s8 %v197
      %v199 = vlaneseq
      %v200 = vshrl.u32 %v199, 7
      %v201 = vsub.s32 %v198, %v200
      %v202 = vrot.slane %v188, %v201
      %v203 = vcombine.high %v195, %v195
      %v204 = vcombine.high %v202, %v202
      %v205 = vcombine.high %v173, %v173
      %v207 = vunpack.c.l.s4 1983009808
      %v208 = vunpack.c.0.s8 %v207
      %v209 = vlaneseq
      %v210 = vshrl.u32 %v209, 7
      %v211 = vsub.s32 %v208, %v210
      %v212 = vrot.slane %v173, %v211
      %v214 = vunpack.c.l.s4 1983009808
      %v215 = vunpack.c.0.s8 %v214
      %v216 = vlaneseq
      %v217 = vshrl.u32 %v216, 7
      %v218 = vsub.s32 %v215, %v217
      %v219 = vrot.slane %v205, %v218
      %v220 = vcombine.high %v212, %v212
      %v221 = vcombine.high %v219, %v219
      %v222 = vcombine.high %v174, %v174
      %v224 = vunpack.c.l.s4 1983009808
      %v225 = vunpack.c.0.s8 %v224
      %v226 = vlaneseq
      %v227 = vshrl.u32 %v226, 7
      %v228 = vsub.s32 %v225, %v227
      %v229 = vrot.slane %v174, %v228
      %v231 = vunpack.c.l.s4 1983009808
      %v232 = vunpack.c.0.s8 %v231
      %v233 = vlaneseq
      %v234 = vshrl.u32 %v233, 7
      %v235 = vsub.s32 %v232, %v234
      %v236 = vrot.slane %v222, %v235
      %v237 = vcombine.high %v229, %v229
      %v238 = vcombine.high %v236, %v236
      %v239 = vcombine.high %v175, %v175
      %v241 = vunpack.c.l.s4 1983009808
      %v242 = vunpack.c.0.s8 %v241
      %v243 = vlaneseq
      %v244 = vshrl.u32 %v243, 7
      %v245 = vsub.s32 %v242, %v244
      %v246 = vrot.slane %v175, %v245
      %v248 = vunpack.c.l.s4 1983009808
      %v249 = vunpack.c.0.s8 %v248
      %v250 = vlaneseq
      %v251 = vshrl.u32 %v250, 7
      %v252 = vsub.s32 %v249, %v251
      %v253 = vrot.slane %v239, %v252
      %v254 = vcombine.high %v246, %v246
      %v255 = vcombine.high %v253, %v253
      %v256 = vcombine.high %v176, %v176
      %v258 = vunpack.c.l.s4 1983009808
      %v259 = vunpack.c.0.s8 %v258
      %v260 = vlaneseq
      %v261 = vshrl.u32 %v260, 7
      %v262 = vsub.s32 %v259, %v261
      %v263 = vrot.slane %v176, %v262
      %v265 = vunpack.c.l.s4 1983009808
      %v266 = vunpack.c.0.s8 %v265
      %v267 = vlaneseq
      %v268 = vshrl.u32 %v267, 7
      %v269 = vsub.s32 %v266, %v268
      %v270 = vrot.slane %v256, %v269
      %v271 = vcombine.high %v263, %v263
      %v272 = vcombine.high %v270, %v270
      %v273 = vcombine.high %v177, %v177
      %v275 = vunpack.c.l.s4 1983009808
      %v276 = vunpack.c.0.s8 %v275
      %v277 = vlaneseq
      %v278 = vshrl.u32 %v277, 7
      %v279 = vsub.s32 %v276, %v278
      %v280 = vrot.slane %v177, %v279
      %v282 = vunpack.c.l.s4 1983009808
      %v283 = vunpack.c.0.s8 %v282
      %v284 = vlaneseq
      %v285 = vshrl.u32 %v284, 7
      %v286 = vsub.s32 %v283, %v285
      %v287 = vrot.slane %v273, %v286
      %v288 = vcombine.high %v280, %v280
      %v289 = vcombine.high %v287, %v287
      %v290 = vcombine.high %v178, %v178
      %v292 = vunpack.c.l.s4 1983009808
      %v293 = vunpack.c.0.s8 %v292
      %v294 = vlaneseq
      %v295 = vshrl.u32 %v294, 7
      %v296 = vsub.s32 %v293, %v295
      %v297 = vrot.slane %v178, %v296
      %v299 = vunpack.c.l.s4 1983009808
      %v300 = vunpack.c.0.s8 %v299
      %v301 = vlaneseq
      %v302 = vshrl.u32 %v301, 7
      %v303 = vsub.s32 %v300, %v302
      %v304 = vrot.slane %v290, %v303
      %v305 = vcombine.high %v297, %v297
      %v306 = vcombine.high %v304, %v304
      %v307 = vcombine.high %v179, %v179
      %v309 = vunpack.c.l.s4 1983009808
      %v310 = vunpack.c.0.s8 %v309
      %v311 = vlaneseq
      %v312 = vshrl.u32 %v311, 7
      %v313 = vsub.s32 %v310, %v312
      %v314 = vrot.slane %v179, %v313
      %v316 = vunpack.c.l.s4 1983009808
      %v317 = vunpack.c.0.s8 %v316
      %v318 = vlaneseq
      %v319 = vshrl.u32 %v318, 7
      %v320 = vsub.s32 %v317, %v319
      %v321 = vrot.slane %v307, %v320
      %v322 = vcombine.high %v314, %v314
      %v323 = vcombine.high %v321, %v321
      %v356 = vpack.c.bf16 %v195, %v195
      %v357 = vpack.c.bf16 %v203, %v203
      %v358 = vpack.c.bf16 %v202, %v202
      %v359 = vpack.c.bf16 %v204, %v204
      %v360 = vpack.c.bf16 %v212, %v212
      %v361 = vpack.c.bf16 %v220, %v220
      %v362 = vpack.c.bf16 %v219, %v219
      %v363 = vpack.c.bf16 %v221, %v221
      %v364 = vpack.c.bf16 %v229, %v229
      %v365 = vpack.c.bf16 %v237, %v237
      %v366 = vpack.c.bf16 %v236, %v236
      %v367 = vpack.c.bf16 %v238, %v238
      %v368 = vpack.c.bf16 %v246, %v246
      %v369 = vpack.c.bf16 %v254, %v254
      %v370 = vpack.c.bf16 %v253, %v253
      %v371 = vpack.c.bf16 %v255, %v255
      %v372 = vpack.c.bf16 %v263, %v263
      %v373 = vpack.c.bf16 %v271, %v271
      %v374 = vpack.c.bf16 %v270, %v270
      %v375 = vpack.c.bf16 %v272, %v272
      %v376 = vpack.c.bf16 %v280, %v280
      %v377 = vpack.c.bf16 %v288, %v288
      %v378 = vpack.c.bf16 %v287, %v287
      %v379 = vpack.c.bf16 %v289, %v289
      %v380 = vpack.c.bf16 %v297, %v297
      %v381 = vpack.c.bf16 %v305, %v305
      %v382 = vpack.c.bf16 %v304, %v304
      %v383 = vpack.c.bf16 %v306, %v306
      %v384 = vpack.c.bf16 %v314, %v314
      %v385 = vpack.c.bf16 %v322, %v322
      %v386 = vpack.c.bf16 %v321, %v321
      %v387 = vpack.c.bf16 %v323, %v323
      %v388 = vld [vmem:[%s1] sm:$0x1]
      %v389 = vpack.c.bf16 %v388, %v388
      %v390 = vld [vmem:[#allocation2] sm:$0x1]
      %392 = vset.pattern.permute.xlu0 0
      %393 = vperm.xlu0 %392, %v390
      %v394 = vpop.permute.xlu0 %393
      %v396 = vlaneseq
      %v397 = vshrl.u32 %v396, 7
      %v398 = vsub.s32 0, %v397
      %v399 = vrot.slane %v394, %v398
      %vm400 = vcmask 15360
      %v402 = vsel %vm400, %v389, 0
      %vm404 = vcmask 1040384
      %v406 = vsel %vm404, %v356, 0
      %v409 = vsel %vm404, %v357, 0
      %v412 = vsel %vm404, %v358, 0
      %v415 = vsel %vm404, %v359, 0
      %v418 = vsel %vm404, %v360, 0
      %v421 = vsel %vm404, %v361, 0
      %v424 = vsel %vm404, %v362, 0
      %v427 = vsel %vm404, %v363, 0
      %v430 = vsel %vm404, %v364, 0
      %v433 = vsel %vm404, %v365, 0
      %v436 = vsel %vm404, %v366, 0
      %v439 = vsel %vm404, %v367, 0
      %v442 = vsel %vm404, %v368, 0
      %v445 = vsel %vm404, %v369, 0
      %v448 = vsel %vm404, %v370, 0
      %v451 = vsel %vm404, %v371, 0
      %v454 = vsel %vm404, %v372, 0
      %v457 = vsel %vm404, %v373, 0
      %v460 = vsel %vm404, %v374, 0
      %v463 = vsel %vm404, %v375, 0
      %v466 = vsel %vm404, %v376, 0
      %v469 = vsel %vm404, %v377, 0
      %v472 = vsel %vm404, %v378, 0
      %v475 = vsel %vm404, %v379, 0
      %v478 = vsel %vm404, %v380, 0
      %v481 = vsel %vm404, %v381, 0
      %v484 = vsel %vm404, %v382, 0
      %v487 = vsel %vm404, %v383, 0
      %v490 = vsel %vm404, %v384, 0
      %v493 = vsel %vm404, %v385, 0
      %v496 = vsel %vm404, %v386, 0
      %v499 = vsel %vm404, %v387, 0
      %501 = vmatprep.subr.bf16.mxu0 0
      %502 = vmatpush1.bf16.msra.mxu0 0
      %503 = vmatprep.subr.bf16.mxu0 0
      %504 = vmatpush1.bf16.msra.mxu0 0
      %505 = vmatprep.subr.bf16.mxu0 0
      %506 = vmatpush1.bf16.msra.mxu0 0
      %507 = vmatprep.subr.bf16.mxu0 0
      %508 = vmatpush1.bf16.msra.mxu0 0
      %509 = vmatprep.subr.bf16.mxu0 0
      %510 = vmatpush1.bf16.msra.mxu0 0
      %511 = vmatprep.subr.bf16.mxu0 0
      %512 = vmatpush1.bf16.msra.mxu0 0
      %513 = vmatprep.subr.bf16.mxu0 0
      %514 = vmatpush1.bf16.msra.mxu0 0
      %515 = vmatprep.subr.bf16.mxu0 %v409
      %516 = vmatpush1.bf16.msra.mxu0 %v406
      %517 = vmatprep.subr.bf16.mxu0 0
      %518 = vmatpush2.bf16.msra.mxu0 0
      %519 = vmatprep.subr.bf16.mxu0 0
      %520 = vmatpush2.bf16.msra.mxu0 0
      %521 = vmatprep.subr.bf16.mxu0 0
      %522 = vmatpush2.bf16.msra.mxu0 0
      %523 = vmatprep.subr.bf16.mxu0 0
      %524 = vmatpush2.bf16.msra.mxu0 0
      %525 = vmatprep.subr.bf16.mxu0 0
      %526 = vmatpush2.bf16.msra.mxu0 0
      %527 = vmatprep.subr.bf16.mxu0 0
      %528 = vmatpush2.bf16.msra.mxu0 0
      %529 = vmatprep.subr.bf16.mxu0 0
      %530 = vmatpush2.bf16.msra.mxu0 0
      %531 = vmatprep.subr.bf16.mxu0 0
      %532 = vmatpush2.bf16.msra.mxu0 0
      %533 = vmatprep.mubr.bf16.mxu0 0
      %534 = vmatmul.mubr.bf16.gmra.mxu0 %v402
      %v535 = vpop.f32.mrf.mxu0
      %v536 = vadd.f32 %v399, %v535
      %v537 = vpop.f32.mrf.mxu0
      %v538 = vadd.f32 %v399, %v537
      %v539 = vpop.f32.mrf.mxu0
      %v540 = vpop.f32.mrf.mxu0
      %541 = vdwg.mxu0
      %542 = vmatprep.subr.bf16.mxu0 0
      %543 = vmatpush1.bf16.msra.mxu0 0
      %544 = vmatprep.subr.bf16.mxu0 0
      %545 = vmatpush1.bf16.msra.mxu0 0
      %546 = vmatprep.subr.bf16.mxu0 0
      %547 = vmatpush1.bf16.msra.mxu0 0
      %548 = vmatprep.subr.bf16.mxu0 0
      %549 = vmatpush1.bf16.msra.mxu0 0
      %550 = vmatprep.subr.bf16.mxu0 0
      %551 = vmatpush1.bf16.msra.mxu0 0
      %552 = vmatprep.subr.bf16.mxu0 0
      %553 = vmatpush1.bf16.msra.mxu0 0
      %554 = vmatprep.subr.bf16.mxu0 0
      %555 = vmatpush1.bf16.msra.mxu0 0
      %556 = vmatprep.subr.bf16.mxu0 %v415
      %557 = vmatpush1.bf16.msra.mxu0 %v412
      %558 = vmatprep.subr.bf16.mxu0 0
      %559 = vmatpush2.bf16.msra.mxu0 0
      %560 = vmatprep.subr.bf16.mxu0 0
      %561 = vmatpush2.bf16.msra.mxu0 0
      %562 = vmatprep.subr.bf16.mxu0 0
      %563 = vmatpush2.bf16.msra.mxu0 0
      %564 = vmatprep.subr.bf16.mxu0 0
      %565 = vmatpush2.bf16.msra.mxu0 0
      %566 = vmatprep.subr.bf16.mxu0 0
      %567 = vmatpush2.bf16.msra.mxu0 0
      %568 = vmatprep.subr.bf16.mxu0 0
      %569 = vmatpush2.bf16.msra.mxu0 0
      %570 = vmatprep.subr.bf16.mxu0 0
      %571 = vmatpush2.bf16.msra.mxu0 0
      %572 = vmatprep.subr.bf16.mxu0 0
      %573 = vmatpush2.bf16.msra.mxu0 0
      %574 = vmatprep.mubr.bf16.mxu0 0
      %575 = vmatmul.mubr.bf16.gmra.mxu0 %v402
      %v576 = vpop.f32.mrf.mxu0
      %v577 = vadd.f32 %v399, %v576
      %v578 = vpop.f32.mrf.mxu0
      %v579 = vadd.f32 %v399, %v578
      %v580 = vpop.f32.mrf.mxu0
      %v581 = vpop.f32.mrf.mxu0
      %582 = vdwg.mxu0
      %583 = vmatprep.subr.bf16.mxu0 0
      %584 = vmatpush1.bf16.msra.mxu0 0
      %585 = vmatprep.subr.bf16.mxu0 0
      %586 = vmatpush1.bf16.msra.mxu0 0
      %587 = vmatprep.subr.bf16.mxu0 0
      %588 = vmatpush1.bf16.msra.mxu0 0
      %589 = vmatprep.subr.bf16.mxu0 0
      %590 = vmatpush1.bf16.msra.mxu0 0
      %591 = vmatprep.subr.bf16.mxu0 0
      %592 = vmatpush1.bf16.msra.mxu0 0
      %593 = vmatprep.subr.bf16.mxu0 0
      %594 = vmatpush1.bf16.msra.mxu0 0
      %595 = vmatprep.subr.bf16.mxu0 0
      %596 = vmatpush1.bf16.msra.mxu0 0
      %597 = vmatprep.subr.bf16.mxu0 %v421
      %598 = vmatpush1.bf16.msra.mxu0 %v418
      %599 = vmatprep.subr.bf16.mxu0 0
      %600 = vmatpush2.bf16.msra.mxu0 0
      %601 = vmatprep.subr.bf16.mxu0 0
      %602 = vmatpush2.bf16.msra.mxu0 0
      %603 = vmatprep.subr.bf16.mxu0 0
      %604 = vmatpush2.bf16.msra.mxu0 0
      %605 = vmatprep.subr.bf16.mxu0 0
      %606 = vmatpush2.bf16.msra.mxu0 0
      %607 = vmatprep.subr.bf16.mxu0 0
      %608 = vmatpush2.bf16.msra.mxu0 0
      %609 = vmatprep.subr.bf16.mxu0 0
      %610 = vmatpush2.bf16.msra.mxu0 0
      %611 = vmatprep.subr.bf16.mxu0 0
      %612 = vmatpush2.bf16.msra.mxu0 0
      %613 = vmatprep.subr.bf16.mxu0 0
      %614 = vmatpush2.bf16.msra.mxu0 0
      %615 = vmatprep.mubr.bf16.mxu0 0
      %616 = vmatmul.mubr.bf16.gmra.mxu0 %v402
      %v617 = vpop.f32.mrf.mxu0
      %v618 = vadd.f32 %v399, %v617
      %v619 = vpop.f32.mrf.mxu0
      %v620 = vadd.f32 %v399, %v619
      %v621 = vpop.f32.mrf.mxu0
      %v622 = vpop.f32.mrf.mxu0
      %623 = vdwg.mxu0
      %624 = vmatprep.subr.bf16.mxu0 0
      %625 = vmatpush1.bf16.msra.mxu0 0
      %626 = vmatprep.subr.bf16.mxu0 0
      %627 = vmatpush1.bf16.msra.mxu0 0
      %628 = vmatprep.subr.bf16.mxu0 0
      %629 = vmatpush1.bf16.msra.mxu0 0
      %630 = vmatprep.subr.bf16.mxu0 0
      %631 = vmatpush1.bf16.msra.mxu0 0
      %632 = vmatprep.subr.bf16.mxu0 0
      %633 = vmatpush1.bf16.msra.mxu0 0
      %634 = vmatprep.subr.bf16.mxu0 0
      %635 = vmatpush1.bf16.msra.mxu0 0
      %636 = vmatprep.subr.bf16.mxu0 0
      %637 = vmatpush1.bf16.msra.mxu0 0
      %638 = vmatprep.subr.bf16.mxu0 %v427
      %639 = vmatpush1.bf16.msra.mxu0 %v424
      %640 = vmatprep.subr.bf16.mxu0 0
      %641 = vmatpush2.bf16.msra.mxu0 0
      %642 = vmatprep.subr.bf16.mxu0 0
      %643 = vmatpush2.bf16.msra.mxu0 0
      %644 = vmatprep.subr.bf16.mxu0 0
      %645 = vmatpush2.bf16.msra.mxu0 0
      %646 = vmatprep.subr.bf16.mxu0 0
      %647 = vmatpush2.bf16.msra.mxu0 0
      %648 = vmatprep.subr.bf16.mxu0 0
      %649 = vmatpush2.bf16.msra.mxu0 0
      %650 = vmatprep.subr.bf16.mxu0 0
      %651 = vmatpush2.bf16.msra.mxu0 0
      %652 = vmatprep.subr.bf16.mxu0 0
      %653 = vmatpush2.bf16.msra.mxu0 0
      %654 = vmatprep.subr.bf16.mxu0 0
      %655 = vmatpush2.bf16.msra.mxu0 0
      %656 = vmatprep.mubr.bf16.mxu0 0
      %657 = vmatmul.mubr.bf16.gmra.mxu0 %v402
      %v658 = vpop.f32.mrf.mxu0
      %v659 = vadd.f32 %v399, %v658
      %v660 = vpop.f32.mrf.mxu0
      %v661 = vadd.f32 %v399, %v660
      %v662 = vpop.f32.mrf.mxu0
      %v663 = vpop.f32.mrf.mxu0
      %664 = vdwg.mxu0
      %665 = vmatprep.subr.bf16.mxu0 0
      %666 = vmatpush1.bf16.msra.mxu0 0
      %667 = vmatprep.subr.bf16.mxu0 0
      %668 = vmatpush1.bf16.msra.mxu0 0
      %669 = vmatprep.subr.bf16.mxu0 0
      %670 = vmatpush1.bf16.msra.mxu0 0
      %671 = vmatprep.subr.bf16.mxu0 0
      %672 = vmatpush1.bf16.msra.mxu0 0
      %673 = vmatprep.subr.bf16.mxu0 0
      %674 = vmatpush1.bf16.msra.mxu0 0
      %675 = vmatprep.subr.bf16.mxu0 0
      %676 = vmatpush1.bf16.msra.mxu0 0
      %677 = vmatprep.subr.bf16.mxu0 0
      %678 = vmatpush1.bf16.msra.mxu0 0
      %679 = vmatprep.subr.bf16.mxu0 %v433
      %680 = vmatpush1.bf16.msra.mxu0 %v430
      %681 = vmatprep.subr.bf16.mxu0 0
      %682 = vmatpush2.bf16.msra.mxu0 0
      %683 = vmatprep.subr.bf16.mxu0 0
      %684 = vmatpush2.bf16.msra.mxu0 0
      %685 = vmatprep.subr.bf16.mxu0 0
      %686 = vmatpush2.bf16.msra.mxu0 0
      %687 = vmatprep.subr.bf16.mxu0 0
      %688 = vmatpush2.bf16.msra.mxu0 0
      %689 = vmatprep.subr.bf16.mxu0 0
      %690 = vmatpush2.bf16.msra.mxu0 0
      %691 = vmatprep.subr.bf16.mxu0 0
      %692 = vmatpush2.bf16.msra.mxu0 0
      %693 = vmatprep.subr.bf16.mxu0 0
      %694 = vmatpush2.bf16.msra.mxu0 0
      %695 = vmatprep.subr.bf16.mxu0 0
      %696 = vmatpush2.bf16.msra.mxu0 0
      %697 = vmatprep.mubr.bf16.mxu0 0
      %698 = vmatmul.mubr.bf16.gmra.mxu0 %v402
      %v699 = vpop.f32.mrf.mxu0
      %v700 = vadd.f32 %v399, %v699
      %v701 = vpop.f32.mrf.mxu0
      %v702 = vadd.f32 %v399, %v701
      %v703 = vpop.f32.mrf.mxu0
      %v704 = vpop.f32.mrf.mxu0
      %705 = vdwg.mxu0
      %706 = vmatprep.subr.bf16.mxu0 0
      %707 = vmatpush1.bf16.msra.mxu0 0
      %708 = vmatprep.subr.bf16.mxu0 0
      %709 = vmatpush1.bf16.msra.mxu0 0
      %710 = vmatprep.subr.bf16.mxu0 0
      %711 = vmatpush1.bf16.msra.mxu0 0
      %712 = vmatprep.subr.bf16.mxu0 0
      %713 = vmatpush1.bf16.msra.mxu0 0
      %714 = vmatprep.subr.bf16.mxu0 0
      %715 = vmatpush1.bf16.msra.mxu0 0
      %716 = vmatprep.subr.bf16.mxu0 0
      %717 = vmatpush1.bf16.msra.mxu0 0
      %718 = vmatprep.subr.bf16.mxu0 0
      %719 = vmatpush1.bf16.msra.mxu0 0
      %720 = vmatprep.subr.bf16.mxu0 %v439
      %721 = vmatpush1.bf16.msra.mxu0 %v436
      %722 = vmatprep.subr.bf16.mxu0 0
      %723 = vmatpush2.bf16.msra.mxu0 0
      %724 = vmatprep.subr.bf16.mxu0 0
      %725 = vmatpush2.bf16.msra.mxu0 0
      %726 = vmatprep.subr.bf16.mxu0 0
      %727 = vmatpush2.bf16.msra.mxu0 0
      %728 = vmatprep.subr.bf16.mxu0 0
      %729 = vmatpush2.bf16.msra.mxu0 0
      %730 = vmatprep.subr.bf16.mxu0 0
      %731 = vmatpush2.bf16.msra.mxu0 0
      %732 = vmatprep.subr.bf16.mxu0 0
      %733 = vmatpush2.bf16.msra.mxu0 0
      %734 = vmatprep.subr.bf16.mxu0 0
      %735 = vmatpush2.bf16.msra.mxu0 0
      %736 = vmatprep.subr.bf16.mxu0 0
      %737 = vmatpush2.bf16.msra.mxu0 0
      %738 = vmatprep.mubr.bf16.mxu0 0
      %739 = vmatmul.mubr.bf16.gmra.mxu0 %v402
      %v740 = vpop.f32.mrf.mxu0
      %v741 = vadd.f32 %v399, %v740
      %v742 = vpop.f32.mrf.mxu0
      %v743 = vadd.f32 %v399, %v742
      %v744 = vpop.f32.mrf.mxu0
      %v745 = vpop.f32.mrf.mxu0
      %746 = vdwg.mxu0
      %747 = vmatprep.subr.bf16.mxu0 0
      %748 = vmatpush1.bf16.msra.mxu0 0
      %749 = vmatprep.subr.bf16.mxu0 0
      %750 = vmatpush1.bf16.msra.mxu0 0
      %751 = vmatprep.subr.bf16.mxu0 0
      %752 = vmatpush1.bf16.msra.mxu0 0
      %753 = vmatprep.subr.bf16.mxu0 0
      %754 = vmatpush1.bf16.msra.mxu0 0
      %755 = vmatprep.subr.bf16.mxu0 0
      %756 = vmatpush1.bf16.msra.mxu0 0
      %757 = vmatprep.subr.bf16.mxu0 0
      %758 = vmatpush1.bf16.msra.mxu0 0
      %759 = vmatprep.subr.bf16.mxu0 0
      %760 = vmatpush1.bf16.msra.mxu0 0
      %761 = vmatprep.subr.bf16.mxu0 %v445
      %762 = vmatpush1.bf16.msra.mxu0 %v442
      %763 = vmatprep.subr.bf16.mxu0 0
      %764 = vmatpush2.bf16.msra.mxu0 0
      %765 = vmatprep.subr.bf16.mxu0 0
      %766 = vmatpush2.bf16.msra.mxu0 0
      %767 = vmatprep.subr.bf16.mxu0 0
      %768 = vmatpush2.bf16.msra.mxu0 0
      %769 = vmatprep.subr.bf16.mxu0 0
      %770 = vmatpush2.bf16.msra.mxu0 0
      %771 = vmatprep.subr.bf16.mxu0 0
      %772 = vmatpush2.bf16.msra.mxu0 0
      %773 = vmatprep.subr.bf16.mxu0 0
      %774 = vmatpush2.bf16.msra.mxu0 0
      %775 = vmatprep.subr.bf16.mxu0 0
      %776 = vmatpush2.bf16.msra.mxu0 0
      %777 = vmatprep.subr.bf16.mxu0 0
      %778 = vmatpush2.bf16.msra.mxu0 0
      %779 = vmatprep.mubr.bf16.mxu0 0
      %780 = vmatmul.mubr.bf16.gmra.mxu0 %v402
      %v781 = vpop.f32.mrf.mxu0
      %v782 = vadd.f32 %v399, %v781
      %v783 = vpop.f32.mrf.mxu0
      %v784 = vadd.f32 %v399, %v783
      %v785 = vpop.f32.mrf.mxu0
      %v786 = vpop.f32.mrf.mxu0
      %787 = vdwg.mxu0
      %788 = vmatprep.subr.bf16.mxu0 0
      %789 = vmatpush1.bf16.msra.mxu0 0
      %790 = vmatprep.subr.bf16.mxu0 0
      %791 = vmatpush1.bf16.msra.mxu0 0
      %792 = vmatprep.subr.bf16.mxu0 0
      %793 = vmatpush1.bf16.msra.mxu0 0
      %794 = vmatprep.subr.bf16.mxu0 0
      %795 = vmatpush1.bf16.msra.mxu0 0
      %796 = vmatprep.subr.bf16.mxu0 0
      %797 = vmatpush1.bf16.msra.mxu0 0
      %798 = vmatprep.subr.bf16.mxu0 0
      %799 = vmatpush1.bf16.msra.mxu0 0
      %800 = vmatprep.subr.bf16.mxu0 0
      %801 = vmatpush1.bf16.msra.mxu0 0
      %802 = vmatprep.subr.bf16.mxu0 %v451
      %803 = vmatpush1.bf16.msra.mxu0 %v448
      %804 = vmatprep.subr.bf16.mxu0 0
      %805 = vmatpush2.bf16.msra.mxu0 0
      %806 = vmatprep.subr.bf16.mxu0 0
      %807 = vmatpush2.bf16.msra.mxu0 0
      %808 = vmatprep.subr.bf16.mxu0 0
      %809 = vmatpush2.bf16.msra.mxu0 0
      %810 = vmatprep.subr.bf16.mxu0 0
      %811 = vmatpush2.bf16.msra.mxu0 0
      %812 = vmatprep.subr.bf16.mxu0 0
      %813 = vmatpush2.bf16.msra.mxu0 0
      %814 = vmatprep.subr.bf16.mxu0 0
      %815 = vmatpush2.bf16.msra.mxu0 0
      %816 = vmatprep.subr.bf16.mxu0 0
      %817 = vmatpush2.bf16.msra.mxu0 0
      %818 = vmatprep.subr.bf16.mxu0 0
      %819 = vmatpush2.bf16.msra.mxu0 0
      %820 = vmatprep.mubr.bf16.mxu0 0
      %821 = vmatmul.mubr.bf16.gmra.mxu0 %v402
      %v822 = vpop.f32.mrf.mxu0
      %v823 = vadd.f32 %v399, %v822
      %v824 = vpop.f32.mrf.mxu0
      %v825 = vadd.f32 %v399, %v824
      %v826 = vpop.f32.mrf.mxu0
      %v827 = vpop.f32.mrf.mxu0
      %828 = vdwg.mxu0
      %829 = vmatprep.subr.bf16.mxu0 0
      %830 = vmatpush1.bf16.msra.mxu0 0
      %831 = vmatprep.subr.bf16.mxu0 0
      %832 = vmatpush1.bf16.msra.mxu0 0
      %833 = vmatprep.subr.bf16.mxu0 0
      %834 = vmatpush1.bf16.msra.mxu0 0
      %835 = vmatprep.subr.bf16.mxu0 0
      %836 = vmatpush1.bf16.msra.mxu0 0
      %837 = vmatprep.subr.bf16.mxu0 0
      %838 = vmatpush1.bf16.msra.mxu0 0
      %839 = vmatprep.subr.bf16.mxu0 0
      %840 = vmatpush1.bf16.msra.mxu0 0
      %841 = vmatprep.subr.bf16.mxu0 0
      %842 = vmatpush1.bf16.msra.mxu0 0
      %843 = vmatprep.subr.bf16.mxu0 %v457
      %844 = vmatpush1.bf16.msra.mxu0 %v454
      %845 = vmatprep.subr.bf16.mxu0 0
      %846 = vmatpush2.bf16.msra.mxu0 0
      %847 = vmatprep.subr.bf16.mxu0 0
      %848 = vmatpush2.bf16.msra.mxu0 0
      %849 = vmatprep.subr.bf16.mxu0 0
      %850 = vmatpush2.bf16.msra.mxu0 0
      %851 = vmatprep.subr.bf16.mxu0 0
      %852 = vmatpush2.bf16.msra.mxu0 0
      %853 = vmatprep.subr.bf16.mxu0 0
      %854 = vmatpush2.bf16.msra.mxu0 0
      %855 = vmatprep.subr.bf16.mxu0 0
      %856 = vmatpush2.bf16.msra.mxu0 0
      %857 = vmatprep.subr.bf16.mxu0 0
      %858 = vmatpush2.bf16.msra.mxu0 0
      %859 = vmatprep.subr.bf16.mxu0 0
      %860 = vmatpush2.bf16.msra.mxu0 0
      %861 = vmatprep.mubr.bf16.mxu0 0
      %862 = vmatmul.mubr.bf16.gmra.mxu0 %v402
      %v863 = vpop.f32.mrf.mxu0
      %v864 = vadd.f32 %v399, %v863
      %v865 = vpop.f32.mrf.mxu0
      %v866 = vadd.f32 %v399, %v865
      %v867 = vpop.f32.mrf.mxu0
      %v868 = vpop.f32.mrf.mxu0
      %869 = vdwg.mxu0
      %870 = vmatprep.subr.bf16.mxu0 0
      %871 = vmatpush1.bf16.msra.mxu0 0
      %872 = vmatprep.subr.bf16.mxu0 0
      %873 = vmatpush1.bf16.msra.mxu0 0
      %874 = vmatprep.subr.bf16.mxu0 0
      %875 = vmatpush1.bf16.msra.mxu0 0
      %876 = vmatprep.subr.bf16.mxu0 0
      %877 = vmatpush1.bf16.msra.mxu0 0
      %878 = vmatprep.subr.bf16.mxu0 0
      %879 = vmatpush1.bf16.msra.mxu0 0
      %880 = vmatprep.subr.bf16.mxu0 0
      %881 = vmatpush1.bf16.msra.mxu0 0
      %882 = vmatprep.subr.bf16.mxu0 0
      %883 = vmatpush1.bf16.msra.mxu0 0
      %884 = vmatprep.subr.bf16.mxu0 %v463
      %885 = vmatpush1.bf16.msra.mxu0 %v460
      %886 = vmatprep.subr.bf16.mxu0 0
      %887 = vmatpush2.bf16.msra.mxu0 0
      %888 = vmatprep.subr.bf16.mxu0 0
      %889 = vmatpush2.bf16.msra.mxu0 0
      %890 = vmatprep.subr.bf16.mxu0 0
      %891 = vmatpush2.bf16.msra.mxu0 0
      %892 = vmatprep.subr.bf16.mxu0 0
      %893 = vmatpush2.bf16.msra.mxu0 0
      %894 = vmatprep.subr.bf16.mxu0 0
      %895 = vmatpush2.bf16.msra.mxu0 0
      %896 = vmatprep.subr.bf16.mxu0 0
      %897 = vmatpush2.bf16.msra.mxu0 0
      %898 = vmatprep.subr.bf16.mxu0 0
      %899 = vmatpush2.bf16.msra.mxu0 0
      %900 = vmatprep.subr.bf16.mxu0 0
      %901 = vmatpush2.bf16.msra.mxu0 0
      %902 = vmatprep.mubr.bf16.mxu0 0
      %903 = vmatmul.mubr.bf16.gmra.mxu0 %v402
      %v904 = vpop.f32.mrf.mxu0
      %v905 = vadd.f32 %v399, %v904
      %v906 = vpop.f32.mrf.mxu0
      %v907 = vadd.f32 %v399, %v906
      %v908 = vpop.f32.mrf.mxu0
      %v909 = vpop.f32.mrf.mxu0
      %910 = vdwg.mxu0
      %911 = vmatprep.subr.bf16.mxu0 0
      %912 = vmatpush1.bf16.msra.mxu0 0
      %913 = vmatprep.subr.bf16.mxu0 0
      %914 = vmatpush1.bf16.msra.mxu0 0
      %915 = vmatprep.subr.bf16.mxu0 0
      %916 = vmatpush1.bf16.msra.mxu0 0
      %917 = vmatprep.subr.bf16.mxu0 0
      %918 = vmatpush1.bf16.msra.mxu0 0
      %919 = vmatprep.subr.bf16.mxu0 0
      %920 = vmatpush1.bf16.msra.mxu0 0
      %921 = vmatprep.subr.bf16.mxu0 0
      %922 = vmatpush1.bf16.msra.mxu0 0
      %923 = vmatprep.subr.bf16.mxu0 0
      %924 = vmatpush1.bf16.msra.mxu0 0
      %925 = vmatprep.subr.bf16.mxu0 %v469
      %926 = vmatpush1.bf16.msra.mxu0 %v466
      %927 = vmatprep.subr.bf16.mxu0 0
      %928 = vmatpush2.bf16.msra.mxu0 0
      %929 = vmatprep.subr.bf16.mxu0 0
      %930 = vmatpush2.bf16.msra.mxu0 0
      %931 = vmatprep.subr.bf16.mxu0 0
      %932 = vmatpush2.bf16.msra.mxu0 0
      %933 = vmatprep.subr.bf16.mxu0 0
      %934 = vmatpush2.bf16.msra.mxu0 0
      %935 = vmatprep.subr.bf16.mxu0 0
      %936 = vmatpush2.bf16.msra.mxu0 0
      %937 = vmatprep.subr.bf16.mxu0 0
      %938 = vmatpush2.bf16.msra.mxu0 0
      %939 = vmatprep.subr.bf16.mxu0 0
      %940 = vmatpush2.bf16.msra.mxu0 0
      %941 = vmatprep.subr.bf16.mxu0 0
      %942 = vmatpush2.bf16.msra.mxu0 0
      %943 = vmatprep.mubr.bf16.mxu0 0
      %944 = vmatmul.mubr.bf16.gmra.mxu0 %v402
      %v945 = vpop.f32.mrf.mxu0
      %v946 = vadd.f32 %v399, %v945
      %v947 = vpop.f32.mrf.mxu0
      %v948 = vadd.f32 %v399, %v947
      %v949 = vpop.f32.mrf.mxu0
      %v950 = vpop.f32.mrf.mxu0
      %951 = vdwg.mxu0
      %952 = vmatprep.subr.bf16.mxu0 0
      %953 = vmatpush1.bf16.msra.mxu0 0
      %954 = vmatprep.subr.bf16.mxu0 0
      %955 = vmatpush1.bf16.msra.mxu0 0
      %956 = vmatprep.subr.bf16.mxu0 0
      %957 = vmatpush1.bf16.msra.mxu0 0
      %958 = vmatprep.subr.bf16.mxu0 0
      %959 = vmatpush1.bf16.msra.mxu0 0
      %960 = vmatprep.subr.bf16.mxu0 0
      %961 = vmatpush1.bf16.msra.mxu0 0
      %962 = vmatprep.subr.bf16.mxu0 0
      %963 = vmatpush1.bf16.msra.mxu0 0
      %964 = vmatprep.subr.bf16.mxu0 0
      %965 = vmatpush1.bf16.msra.mxu0 0
      %966 = vmatprep.subr.bf16.mxu0 %v475
      %967 = vmatpush1.bf16.msra.mxu0 %v472
      %968 = vmatprep.subr.bf16.mxu0 0
      %969 = vmatpush2.bf16.msra.mxu0 0
      %970 = vmatprep.subr.bf16.mxu0 0
      %971 = vmatpush2.bf16.msra.mxu0 0
      %972 = vmatprep.subr.bf16.mxu0 0
      %973 = vmatpush2.bf16.msra.mxu0 0
      %974 = vmatprep.subr.bf16.mxu0 0
      %975 = vmatpush2.bf16.msra.mxu0 0
      %976 = vmatprep.subr.bf16.mxu0 0
      %977 = vmatpush2.bf16.msra.mxu0 0
      %978 = vmatprep.subr.bf16.mxu0 0
      %979 = vmatpush2.bf16.msra.mxu0 0
      %980 = vmatprep.subr.bf16.mxu0 0
      %981 = vmatpush2.bf16.msra.mxu0 0
      %982 = vmatprep.subr.bf16.mxu0 0
      %983 = vmatpush2.bf16.msra.mxu0 0
      %984 = vmatprep.mubr.bf16.mxu0 0
      %985 = vmatmul.mubr.bf16.gmra.mxu0 %v402
      %v986 = vpop.f32.mrf.mxu0
      %v987 = vadd.f32 %v399, %v986
      %v988 = vpop.f32.mrf.mxu0
      %v989 = vadd.f32 %v399, %v988
      %v990 = vpop.f32.mrf.mxu0
      %v991 = vpop.f32.mrf.mxu0
      %992 = vdwg.mxu0
      %993 = vmatprep.subr.bf16.mxu0 0
      %994 = vmatpush1.bf16.msra.mxu0 0
      %995 = vmatprep.subr.bf16.mxu0 0
      %996 = vmatpush1.bf16.msra.mxu0 0
      %997 = vmatprep.subr.bf16.mxu0 0
      %998 = vmatpush1.bf16.msra.mxu0 0
      %999 = vmatprep.subr.bf16.mxu0 0
      %1000 = vmatpush1.bf16.msra.mxu0 0
      %1001 = vmatprep.subr.bf16.mxu0 0
      %1002 = vmatpush1.bf16.msra.mxu0 0
      %1003 = vmatprep.subr.bf16.mxu0 0
      %1004 = vmatpush1.bf16.msra.mxu0 0
      %1005 = vmatprep.subr.bf16.mxu0 0
      %1006 = vmatpush1.bf16.msra.mxu0 0
      %1007 = vmatprep.subr.bf16.mxu0 %v481
      %1008 = vmatpush1.bf16.msra.mxu0 %v478
      %1009 = vmatprep.subr.bf16.mxu0 0
      %1010 = vmatpush2.bf16.msra.mxu0 0
      %1011 = vmatprep.subr.bf16.mxu0 0
      %1012 = vmatpush2.bf16.msra.mxu0 0
      %1013 = vmatprep.subr.bf16.mxu0 0
      %1014 = vmatpush2.bf16.msra.mxu0 0
      %1015 = vmatprep.subr.bf16.mxu0 0
      %1016 = vmatpush2.bf16.msra.mxu0 0
      %1017 = vmatprep.subr.bf16.mxu0 0
      %1018 = vmatpush2.bf16.msra.mxu0 0
      %1019 = vmatprep.subr.bf16.mxu0 0
      %1020 = vmatpush2.bf16.msra.mxu0 0
      %1021 = vmatprep.subr.bf16.mxu0 0
      %1022 = vmatpush2.bf16.msra.mxu0 0
      %1023 = vmatprep.subr.bf16.mxu0 0
      %1024 = vmatpush2.bf16.msra.mxu0 0
      %1025 = vmatprep.mubr.bf16.mxu0 0
      %1026 = vmatmul.mubr.bf16.gmra.mxu0 %v402
      %v1027 = vpop.f32.mrf.mxu0
      %v1028 = vadd.f32 %v399, %v1027
      %v1029 = vpop.f32.mrf.mxu0
      %v1030 = vadd.f32 %v399, %v1029
      %v1031 = vpop.f32.mrf.mxu0
      %v1032 = vpop.f32.mrf.mxu0
      %1033 = vdwg.mxu0
      %1034 = vmatprep.subr.bf16.mxu0 0
      %1035 = vmatpush1.bf16.msra.mxu0 0
      %1036 = vmatprep.subr.bf16.mxu0 0
      %1037 = vmatpush1.bf16.msra.mxu0 0
      %1038 = vmatprep.subr.bf16.mxu0 0
      %1039 = vmatpush1.bf16.msra.mxu0 0
      %1040 = vmatprep.subr.bf16.mxu0 0
      %1041 = vmatpush1.bf16.msra.mxu0 0
      %1042 = vmatprep.subr.bf16.mxu0 0
      %1043 = vmatpush1.bf16.msra.mxu0 0
      %1044 = vmatprep.subr.bf16.mxu0 0
      %1045 = vmatpush1.bf16.msra.mxu0 0
      %1046 = vmatprep.subr.bf16.mxu0 0
      %1047 = vmatpush1.bf16.msra.mxu0 0
      %1048 = vmatprep.subr.bf16.mxu0 %v487
      %1049 = vmatpush1.bf16.msra.mxu0 %v484
      %1050 = vmatprep.subr.bf16.mxu0 0
      %1051 = vmatpush2.bf16.msra.mxu0 0
      %1052 = vmatprep.subr.bf16.mxu0 0
      %1053 = vmatpush2.bf16.msra.mxu0 0
      %1054 = vmatprep.subr.bf16.mxu0 0
      %1055 = vmatpush2.bf16.msra.mxu0 0
      %1056 = vmatprep.subr.bf16.mxu0 0
      %1057 = vmatpush2.bf16.msra.mxu0 0
      %1058 = vmatprep.subr.bf16.mxu0 0
      %1059 = vmatpush2.bf16.msra.mxu0 0
      %1060 = vmatprep.subr.bf16.mxu0 0
      %1061 = vmatpush2.bf16.msra.mxu0 0
      %1062 = vmatprep.subr.bf16.mxu0 0
      %1063 = vmatpush2.bf16.msra.mxu0 0
      %1064 = vmatprep.subr.bf16.mxu0 0
      %1065 = vmatpush2.bf16.msra.mxu0 0
      %1066 = vmatprep.mubr.bf16.mxu0 0
      %1067 = vmatmul.mubr.bf16.gmra.mxu0 %v402
      %v1068 = vpop.f32.mrf.mxu0
      %v1069 = vadd.f32 %v399, %v1068
      %v1070 = vpop.f32.mrf.mxu0
      %v1071 = vadd.f32 %v399, %v1070
      %v1072 = vpop.f32.mrf.mxu0
      %v1073 = vpop.f32.mrf.mxu0
      %1074 = vdwg.mxu0
      %1075 = vmatprep.subr.bf16.mxu0 0
      %1076 = vmatpush1.bf16.msra.mxu0 0
      %1077 = vmatprep.subr.bf16.mxu0 0
      %1078 = vmatpush1.bf16.msra.mxu0 0
      %1079 = vmatprep.subr.bf16.mxu0 0
      %1080 = vmatpush1.bf16.msra.mxu0 0
      %1081 = vmatprep.subr.bf16.mxu0 0
      %1082 = vmatpush1.bf16.msra.mxu0 0
      %1083 = vmatprep.subr.bf16.mxu0 0
      %1084 = vmatpush1.bf16.msra.mxu0 0
      %1085 = vmatprep.subr.bf16.mxu0 0
      %1086 = vmatpush1.bf16.msra.mxu0 0
      %1087 = vmatprep.subr.bf16.mxu0 0
      %1088 = vmatpush1.bf16.msra.mxu0 0
      %1089 = vmatprep.subr.bf16.mxu0 %v493
      %1090 = vmatpush1.bf16.msra.mxu0 %v490
      %1091 = vmatprep.subr.bf16.mxu0 0
      %1092 = vmatpush2.bf16.msra.mxu0 0
      %1093 = vmatprep.subr.bf16.mxu0 0
      %1094 = vmatpush2.bf16.msra.mxu0 0
      %1095 = vmatprep.subr.bf16.mxu0 0
      %1096 = vmatpush2.bf16.msra.mxu0 0
      %1097 = vmatprep.subr.bf16.mxu0 0
      %1098 = vmatpush2.bf16.msra.mxu0 0
      %1099 = vmatprep.subr.bf16.mxu0 0
      %1100 = vmatpush2.bf16.msra.mxu0 0
      %1101 = vmatprep.subr.bf16.mxu0 0
      %1102 = vmatpush2.bf16.msra.mxu0 0
      %1103 = vmatprep.subr.bf16.mxu0 0
      %1104 = vmatpush2.bf16.msra.mxu0 0
      %1105 = vmatprep.subr.bf16.mxu0 0
      %1106 = vmatpush2.bf16.msra.mxu0 0
      %1107 = vmatprep.mubr.bf16.mxu0 0
      %1108 = vmatmul.mubr.bf16.gmra.mxu0 %v402
      %v1109 = vpop.f32.mrf.mxu0
      %v1110 = vadd.f32 %v399, %v1109
      %v1111 = vpop.f32.mrf.mxu0
      %v1112 = vadd.f32 %v399, %v1111
      %v1113 = vpop.f32.mrf.mxu0
      %v1114 = vpop.f32.mrf.mxu0
      %1115 = vdwg.mxu0
      %1116 = vmatprep.subr.bf16.mxu0 0
      %1117 = vmatpush1.bf16.msra.mxu0 0
      %1118 = vmatprep.subr.bf16.mxu0 0
      %1119 = vmatpush1.bf16.msra.mxu0 0
      %1120 = vmatprep.subr.bf16.mxu0 0
      %1121 = vmatpush1.bf16.msra.mxu0 0
      %1122 = vmatprep.subr.bf16.mxu0 0
      %1123 = vmatpush1.bf16.msra.mxu0 0
      %1124 = vmatprep.subr.bf16.mxu0 0
      %1125 = vmatpush1.bf16.msra.mxu0 0
      %1126 = vmatprep.subr.bf16.mxu0 0
      %1127 = vmatpush1.bf16.msra.mxu0 0
      %1128 = vmatprep.subr.bf16.mxu0 0
      %1129 = vmatpush1.bf16.msra.mxu0 0
      %1130 = vmatprep.subr.bf16.mxu0 %v499
      %1131 = vmatpush1.bf16.msra.mxu0 %v496
      %1132 = vmatprep.subr.bf16.mxu0 0
      %1133 = vmatpush2.bf16.msra.mxu0 0
      %1134 = vmatprep.subr.bf16.mxu0 0
      %1135 = vmatpush2.bf16.msra.mxu0 0
      %1136 = vmatprep.subr.bf16.mxu0 0
      %1137 = vmatpush2.bf16.msra.mxu0 0
      %1138 = vmatprep.subr.bf16.mxu0 0
      %1139 = vmatpush2.bf16.msra.mxu0 0
      %1140 = vmatprep.subr.bf16.mxu0 0
      %1141 = vmatpush2.bf16.msra.mxu0 0
      %1142 = vmatprep.subr.bf16.mxu0 0
      %1143 = vmatpush2.bf16.msra.mxu0 0
      %1144 = vmatprep.subr.bf16.mxu0 0
      %1145 = vmatpush2.bf16.msra.mxu0 0
      %1146 = vmatprep.subr.bf16.mxu0 0
      %1147 = vmatpush2.bf16.msra.mxu0 0
      %1148 = vmatprep.mubr.bf16.mxu0 0
      %1149 = vmatmul.mubr.bf16.gmra.mxu0 %v402
      %v1150 = vpop.f32.mrf.mxu0
      %v1151 = vadd.f32 %v399, %v1150
      %v1152 = vpop.f32.mrf.mxu0
      %v1153 = vadd.f32 %v399, %v1152
      %v1154 = vpop.f32.mrf.mxu0
      %v1155 = vpop.f32.mrf.mxu0
      %1156 = vdwg.mxu0
      %v1189 = vcombine.low %v536, %v538
      %v1190 = vcombine.low %v577, %v579
      %v1191 = vcombine.low %v618, %v620
      %v1192 = vcombine.low %v659, %v661
      %v1194 = vunpack.c.l.s4 1966171168
      %v1195 = vunpack.c.0.s8 %v1194
      %v1196 = vlaneseq
      %v1197 = vshrl.u32 %v1196, 7
      %v1198 = vsub.s32 %v1195, %v1197
      %v1199 = vrot.slane %v1189, %v1198
      %v1201 = vunpack.c.l.s4 1966171168
      %v1202 = vunpack.c.0.s8 %v1201
      %v1203 = vlaneseq
      %v1204 = vshrl.u32 %v1203, 7
      %v1205 = vsub.s32 %v1202, %v1204
      %v1206 = vrot.slane %v1190, %v1205
      %v1208 = vunpack.c.l.s4 1966171168
      %v1209 = vunpack.c.0.s8 %v1208
      %v1210 = vlaneseq
      %v1211 = vshrl.u32 %v1210, 7
      %v1212 = vsub.s32 %v1209, %v1211
      %v1213 = vrot.slane %v1191, %v1212
      %v1215 = vunpack.c.l.s4 1966171168
      %v1216 = vunpack.c.0.s8 %v1215
      %v1217 = vlaneseq
      %v1218 = vshrl.u32 %v1217, 7
      %v1219 = vsub.s32 %v1216, %v1218
      %v1220 = vrot.slane %v1192, %v1219
      %v1221 = vcombine.low %v1199, %v1206
      %v1222 = vcombine.low %v1213, %v1220
      %v1224 = vunpack.c.l.s4 1966171168
      %v1225 = vunpack.c.0.s8 %v1224
      %v1226 = vlaneseq
      %v1227 = vshrl.u32 %v1226, 7
      %v1228 = vsub.s32 %v1225, %v1227
      %v1229 = vrot.slane %v1221, %v1228
      %v1231 = vunpack.c.l.s4 1966171168
      %v1232 = vunpack.c.0.s8 %v1231
      %v1233 = vlaneseq
      %v1234 = vshrl.u32 %v1233, 7
      %v1235 = vsub.s32 %v1232, %v1234
      %v1236 = vrot.slane %v1222, %v1235
      %v1237 = vcombine.low %v1229, %v1236
      %v1238 = vcombine.low %v700, %v702
      %v1239 = vcombine.low %v741, %v743
      %v1240 = vcombine.low %v782, %v784
      %v1241 = vcombine.low %v823, %v825
      %v1243 = vunpack.c.l.s4 1966171168
      %v1244 = vunpack.c.0.s8 %v1243
      %v1245 = vlaneseq
      %v1246 = vshrl.u32 %v1245, 7
      %v1247 = vsub.s32 %v1244, %v1246
      %v1248 = vrot.slane %v1238, %v1247
      %v1250 = vunpack.c.l.s4 1966171168
      %v1251 = vunpack.c.0.s8 %v1250
      %v1252 = vlaneseq
      %v1253 = vshrl.u32 %v1252, 7
      %v1254 = vsub.s32 %v1251, %v1253
      %v1255 = vrot.slane %v1239, %v1254
      %v1257 = vunpack.c.l.s4 1966171168
      %v1258 = vunpack.c.0.s8 %v1257
      %v1259 = vlaneseq
      %v1260 = vshrl.u32 %v1259, 7
      %v1261 = vsub.s32 %v1258, %v1260
      %v1262 = vrot.slane %v1240, %v1261
      %v1264 = vunpack.c.l.s4 1966171168
      %v1265 = vunpack.c.0.s8 %v1264
      %v1266 = vlaneseq
      %v1267 = vshrl.u32 %v1266, 7
      %v1268 = vsub.s32 %v1265, %v1267
      %v1269 = vrot.slane %v1241, %v1268
      %v1270 = vcombine.low %v1248, %v1255
      %v1271 = vcombine.low %v1262, %v1269
      %v1273 = vunpack.c.l.s4 1966171168
      %v1274 = vunpack.c.0.s8 %v1273
      %v1275 = vlaneseq
      %v1276 = vshrl.u32 %v1275, 7
      %v1277 = vsub.s32 %v1274, %v1276
      %v1278 = vrot.slane %v1270, %v1277
      %v1280 = vunpack.c.l.s4 1966171168
      %v1281 = vunpack.c.0.s8 %v1280
      %v1282 = vlaneseq
      %v1283 = vshrl.u32 %v1282, 7
      %v1284 = vsub.s32 %v1281, %v1283
      %v1285 = vrot.slane %v1271, %v1284
      %v1286 = vcombine.low %v1278, %v1285
      %v1287 = vcombine.low %v864, %v866
      %v1288 = vcombine.low %v905, %v907
      %v1289 = vcombine.low %v946, %v948
      %v1290 = vcombine.low %v987, %v989
      %v1292 = vunpack.c.l.s4 1966171168
      %v1293 = vunpack.c.0.s8 %v1292
      %v1294 = vlaneseq
      %v1295 = vshrl.u32 %v1294, 7
      %v1296 = vsub.s32 %v1293, %v1295
      %v1297 = vrot.slane %v1287, %v1296
      %v1299 = vunpack.c.l.s4 1966171168
      %v1300 = vunpack.c.0.s8 %v1299
      %v1301 = vlaneseq
      %v1302 = vshrl.u32 %v1301, 7
      %v1303 = vsub.s32 %v1300, %v1302
      %v1304 = vrot.slane %v1288, %v1303
      %v1306 = vunpack.c.l.s4 1966171168
      %v1307 = vunpack.c.0.s8 %v1306
      %v1308 = vlaneseq
      %v1309 = vshrl.u32 %v1308, 7
      %v1310 = vsub.s32 %v1307, %v1309
      %v1311 = vrot.slane %v1289, %v1310
      %v1313 = vunpack.c.l.s4 1966171168
      %v1314 = vunpack.c.0.s8 %v1313
      %v1315 = vlaneseq
      %v1316 = vshrl.u32 %v1315, 7
      %v1317 = vsub.s32 %v1314, %v1316
      %v1318 = vrot.slane %v1290, %v1317
      %v1319 = vcombine.low %v1297, %v1304
      %v1320 = vcombine.low %v1311, %v1318
      %v1322 = vunpack.c.l.s4 1966171168
      %v1323 = vunpack.c.0.s8 %v1322
      %v1324 = vlaneseq
      %v1325 = vshrl.u32 %v1324, 7
      %v1326 = vsub.s32 %v1323, %v1325
      %v1327 = vrot.slane %v1319, %v1326
      %v1329 = vunpack.c.l.s4 1966171168
      %v1330 = vunpack.c.0.s8 %v1329
      %v1331 = vlaneseq
      %v1332 = vshrl.u32 %v1331, 7
      %v1333 = vsub.s32 %v1330, %v1332
      %v1334 = vrot.slane %v1320, %v1333
      %v1335 = vcombine.low %v1327, %v1334
      %v1336 = vcombine.low %v1028, %v1030
      %v1337 = vcombine.low %v1069, %v1071
      %v1338 = vcombine.low %v1110, %v1112
      %v1339 = vcombine.low %v1151, %v1153
      %v1341 = vunpack.c.l.s4 1966171168
      %v1342 = vunpack.c.0.s8 %v1341
      %v1343 = vlaneseq
      %v1344 = vshrl.u32 %v1343, 7
      %v1345 = vsub.s32 %v1342, %v1344
      %v1346 = vrot.slane %v1336, %v1345
      %v1348 = vunpack.c.l.s4 1966171168
      %v1349 = vunpack.c.0.s8 %v1348
      %v1350 = vlaneseq
      %v1351 = vshrl.u32 %v1350, 7
      %v1352 = vsub.s32 %v1349, %v1351
      %v1353 = vrot.slane %v1337, %v1352
      %v1355 = vunpack.c.l.s4 1966171168
      %v1356 = vunpack.c.0.s8 %v1355
      %v1357 = vlaneseq
      %v1358 = vshrl.u32 %v1357, 7
      %v1359 = vsub.s32 %v1356, %v1358
      %v1360 = vrot.slane %v1338, %v1359
      %v1362 = vunpack.c.l.s4 1966171168
      %v1363 = vunpack.c.0.s8 %v1362
      %v1364 = vlaneseq
      %v1365 = vshrl.u32 %v1364, 7
      %v1366 = vsub.s32 %v1363, %v1365
      %v1367 = vrot.slane %v1339, %v1366
      %v1368 = vcombine.low %v1346, %v1353
      %v1369 = vcombine.low %v1360, %v1367
      %v1371 = vunpack.c.l.s4 1966171168
      %v1372 = vunpack.c.0.s8 %v1371
      %v1373 = vlaneseq
      %v1374 = vshrl.u32 %v1373, 7
      %v1375 = vsub.s32 %v1372, %v1374
      %v1376 = vrot.slane %v1368, %v1375
      %v1378 = vunpack.c.l.s4 1966171168
      %v1379 = vunpack.c.0.s8 %v1378
      %v1380 = vlaneseq
      %v1381 = vshrl.u32 %v1380, 7
      %v1382 = vsub.s32 %v1379, %v1381
      %v1383 = vrot.slane %v1369, %v1382
      %v1384 = vcombine.low %v1376, %v1383
      %1389 = vst [vmem:[%s170] sm:$0xff] %v1237
      %1390 = vst [vmem:[%s170 + $0x8] sm:$0xff] %v1286
      %1391 = vst [vmem:[%s170 + $0x10] sm:$0xff] %v1335
      %1392 = vst [vmem:[%s170 + $0x18] sm:$0xff] %v1384
      %p1393 = scmp.lt.s32.totalorder %s16, 1
      %s1394 = scalar_select %p1393, %s16, 1
      %s1395 = smul.addr %s1394, 32
      %s1396 = scalar_lea.vmem %s3, %s1395
      // Predicated region
      $region33: #{_conv1x1.1} parent=31 // pred_check
        %p1397 = pneg %p102
      $region34: #{_conv1x1.1} parent=31 // pred_check_branch
        %1399 = sbr.rel (%p1397) target = $region36
      $region35: #{_conv1x1.1} parent=31 // pred_region
        _
      $region36: #{_conv1x1.1} parent=31 // pred_fallthru
        _
    $region32: #{_conv1x1.1} parent=5 // pred_fallthru
      _
    %p1400 = scmp.le.s32.totalorder 2, %s11
    // Predicated region
    $region37: #{_conv1x1.1} parent=5 // pred_check
      %p1401 = pneg %p1400
    $region38: #{_conv1x1.1} parent=5 // pred_check_branch
      %1403 = sbr.rel (%p1401) target = $region40
    $region39: #{_conv1x1.1} parent=5 // pred_region
      %s1404 = ssub.s32 %s11, 2
      // Predicated region
      $region41: #{_conv1x1.1} parent=39 // pred_check
        %p1405 = pneg %p108
      $region42: #{_conv1x1.1} parent=39 // pred_check_branch
        %1407 = sbr.rel (%p1405) target = $region44
      $region43: #{_conv1x1.1} parent=39 // pred_region
        %p1408 = scmp.lt.s32.totalorder %s17, 1
        %s1409 = scalar_select %p1408, %s17, 1
        %s1410 = smul.addr %s1409, 32
        %s1411 = scalar_lea.vmem %s3, %s1410
      $region44: #{_conv1x1.1} parent=39 // pred_fallthru
        _
    $region40: #{_conv1x1.1} parent=5 // pred_fallthru
      _
  $region6: #{_conv1x1.1} parent=0 // loop_footer
    %s15 = sadd.s32 1, %s11
  $region7: #{_conv1x1.1} parent=0 // loop_footer_branch
    %10 = sbr.rel target = $region3
  $region8: #{_conv1x1.1} parent=0 // loop_exit
    _

</llo_original>
